<compile_context>
chip_gen: v7x
topology: tpu7x:2x2x1
jax: 0.10.0
libtpu: 0.0.40
codegen_flags: <defaults>
</compile_context>

<pallas_src>
import functools

import jax
import jax.numpy as jnp
from jax.experimental import pallas as pl
from jax.experimental.pallas import tpu as pltpu


def _round_up(v, m):
    return (v + m - 1) // m * m


def _vmem_capacity_bytes():
    try:
        info = pltpu.get_tpu_info()
        return int(getattr(info, "vmem_capacity_bytes", 64 << 20))
    except Exception:
        return 64 << 20  # conservative (v7x-sized) fallback


def _hashing_head_kernel(
    x_ref,      # (TB, C, THW)   f32    native-layout input chunk
    wf_ref,     # (C, Dp)        bf16   stand-in backbone projection (padded)
    w12_ref,    # (Dp, NCP+256)  bf16   fused [linear1 (padded) | linear2]
    w3_ref,     # (256, 128)     bf16
    w4_ref,     # (128, 128)     bf16
    w5_ref,     # (128, 128)     bf16   linear5 padded 3 -> 128
    out_ref,    # (TB, NCP)      f32
    *rest,      # [feats_ref (TB, Dp)], margin_ref (1, 1, 128), acc_ref (TB, C)
    ncp,
    inv_hw,
    write_feats,
):
    if write_feats:
        feats_ref, margin_ref, acc_ref = rest
    else:
        margin_ref, acc_ref = rest

    j = pl.program_id(1)

    # Partial spatial sum for this HW chunk (f32 native, lane reduction).
    part = jnp.sum(x_ref[...], axis=-1)                        # (TB, C) f32

    @pl.when(j == 0)
    def _():
        acc_ref[...] = jnp.zeros_like(acc_ref)

    acc_ref[...] += part

    @pl.when(j == pl.num_programs(1) - 1)
    def _():
        pooled = acc_ref[...] * inv_hw                          # (TB, C) f32

        feats = jnp.dot(pooled.astype(jnp.bfloat16), wf_ref[...],
                        preferred_element_type=jnp.float32)     # (TB, Dp)
        if write_feats:
            feats_ref[...] = feats

        # Fused linear1 | linear2 (one MXU pass instead of two tiny-M passes).
        t = jnp.dot(feats.astype(jnp.bfloat16), w12_ref[...],
                    preferred_element_type=jnp.float32)         # (TB, NCP+256)
        out_ref[...] = t[:, :ncp]                               # linear1 (padded lanes)

        # Margin branch.
        m = jnp.maximum(t[:, ncp:], 0.0)                        # relu(linear2)
        m = jnp.maximum(
            jnp.dot(m.astype(jnp.bfloat16), w3_ref[...],
                    preferred_element_type=jnp.float32), 0.0)
        m = jnp.maximum(
            jnp.dot(m.astype(jnp.bfloat16), w4_ref[...],
                    preferred_element_type=jnp.float32), 0.0)
        m = jnp.dot(m.astype(jnp.bfloat16), w5_ref[...],
                    preferred_element_type=jnp.float32)         # (TB, 128)

        # Per-batch-tile partial of torch.norm(margin, p=1, dim=0); reduced
        # over batch tiles in the wrapper.  Lane-dense (1, 1, 128) slab.
        part_l1 = jnp.sum(jnp.abs(m), axis=0, keepdims=True)    # (1, 128)
        margin_ref[...] = part_l1.reshape(1, 1, 128)


@functools.partial(jax.jit,
                   static_argnames=("return_feat", "x_buffer_budget_bytes"))
def hashing_model_forward(x, y, params, return_feat=False,
                          x_buffer_budget_bytes=None):
    """x: (B, C, H, W) float32 (NCHW), y: (B, 1) domain tag (unused)."""
    del y  # TODO(synk): DTag.set_domain_tag side effect not representable.
    B, C, H, W = x.shape
    HW = H * W

    # Native layout, zero-copy view: (B, C, H*W).  HW is the lane axis.
    x_r = x.reshape(B, C, HW)

    # ---- weights: pad to lane-friendly widths, cast to bf16 (MXU-native) ----
    wf = params["wf"]
    w1 = params["w1"]
    w2 = params["w2"]
    w3 = params["w3"].astype(jnp.bfloat16)
    w4 = params["w4"].astype(jnp.bfloat16)
    w5 = params["w5"]

    D = wf.shape[1]
    d_pad = _round_up(D, 128)
    num_classes = w1.shape[1]
    ncp = _round_up(num_classes, 128)

    wf_p = jnp.pad(wf, ((0, 0), (0, d_pad - D))).astype(jnp.bfloat16)
    w1p = jnp.pad(w1, ((0, d_pad - D), (0, ncp - num_classes)))
    w2p = jnp.pad(w2, ((0, d_pad - D), (0, 0)))
    w12 = jnp.concatenate([w1p, w2p], axis=1).astype(jnp.bfloat16)  # (Dp, ncp+256)
    w5p = jnp.pad(w5, ((0, 0), (0, 128 - w5.shape[1]))).astype(jnp.bfloat16)

    # ---- per-generation budgets ---------------------------------------------
    vmem_cap = _vmem_capacity_bytes()
    if x_buffer_budget_bytes is None:
        x_budget = max(1 << 20, int(vmem_cap * 0.28))   # ~18 MiB v7x, ~36 MiB v5e/v6e
    else:
        x_budget = int(x_buffer_budget_bytes)

    c_sub = _round_up(C, 8)  # sublane padding of the C axis inside a tile

    # ---- HW chunk selection (keeps VMEM decoupled from H*W*C) ---------------
    if HW % 128 != 0 or HW <= 128:
        # TODO(synk): non-128-divisible HW cannot be chunked without masked
        # partial blocks; fall back to a single full-HW chunk.
        thw = HW
    else:
        max_lanes = max(128, (x_budget // (8 * c_sub * 4)) // 128 * 128)
        if HW <= max_lanes:
            thw = HW
        else:
            thw = 128
            t = 256
            while t <= max_lanes:
                if HW % t == 0:
                    thw = t
                t += 128
    num_hw = HW // thw

    # ---- batch tile selection ------------------------------------------------
    row_bytes = c_sub * _round_up(thw, 128) * 4           # one batch row of the x tile
    tb_cap = max(8, min(512, (x_budget // row_bytes) // 8 * 8))
    if B <= 8 or (B < 16 and B * row_bytes <= x_budget):
        tb = B                                             # single tile, full batch block
    else:
        # >=2 batch tiles so the "parallel" axis feeds both v7x TensorCores.
        tb = min(tb_cap, max(8, (B // 2) // 8 * 8))
        if B % tb != 0:
            for cand in range(tb, 7, -8):                  # prefer divisors: no pad copy
                if B % cand == 0:
                    tb = cand
                    break
    b_pad = -(-B // tb) * tb
    num_b = b_pad // tb
    if b_pad > B:
        x_r = jnp.pad(x_r, ((0, b_pad - B), (0, 0), (0, 0)))

    # ---- VMEM estimate (lane/sublane padding + double buffering) ------------
    x_tile_bytes = tb * c_sub * _round_up(thw, 128) * 4
    w_bytes = 2 * (wf_p.size + w12.size + w3.size + w4.size + w5p.size)  # bf16
    out_bytes = _round_up(tb, 8) * ncp * 4 + 8 * 128 * 4
    if return_feat:
        out_bytes += _round_up(tb, 8) * d_pad * 4
    acc_bytes = _round_up(tb, 8) * 128 * 4
    est = 2 * x_tile_bytes + 2 * w_bytes + 2 * out_bytes + acc_bytes
    vmem_limit = max(est + (4 << 20), 32 << 20)
    vmem_limit = int(min(vmem_limit, vmem_cap * 3 // 4))

    # ---- specs ----------------------------------------------------------------
    in_specs = [
        pl.BlockSpec((tb, C, thw), lambda i, j: (i, 0, j)),   # x: batch x HW chunks
        pl.BlockSpec(wf_p.shape, lambda i, j: (0, 0)),        # weights: resident
        pl.BlockSpec(w12.shape, lambda i, j: (0, 0)),
        pl.BlockSpec(w3.shape, lambda i, j: (0, 0)),
        pl.BlockSpec(w4.shape, lambda i, j: (0, 0)),
        pl.BlockSpec(w5p.shape, lambda i, j: (0, 0)),
    ]

    out_shape = [jax.ShapeDtypeStruct((b_pad, ncp), jnp.float32)]
    out_specs = [pl.BlockSpec((tb, ncp), lambda i, j: (i, 0))]
    if return_feat:
        out_shape.append(jax.ShapeDtypeStruct((b_pad, d_pad), jnp.float32))
        out_specs.append(pl.BlockSpec((tb, d_pad), lambda i, j: (i, 0)))
    out_shape.append(jax.ShapeDtypeStruct((num_b, 1, 128), jnp.float32))
    out_specs.append(pl.BlockSpec((1, 1, 128), lambda i, j: (i, 0, 0)))

    results = pl.pallas_call(
        functools.partial(_hashing_head_kernel, ncp=ncp,
                          inv_hw=1.0 / float(HW), write_feats=return_feat),
        out_shape=tuple(out_shape),
        grid=(num_b, num_hw),
        in_specs=in_specs,
        out_specs=tuple(out_specs),
        scratch_shapes=[pltpu.VMEM((tb, C), jnp.float32)],    # pooled-sum accumulator
        compiler_params=pltpu.CompilerParams(
            dimension_semantics=("parallel", "arbitrary"),
            vmem_limit_bytes=vmem_limit,
        ),
    )(x_r, wf_p, w12, w3, w4, w5p)

    if return_feat:
        out_p, feats_p, margin_p = results
    else:
        out_p, margin_p = results

    out = out_p[:B, :num_classes]
    margin = jnp.sum(margin_p[:, 0, :], axis=0)[:3]      # finish L1 over batch tiles

    if return_feat:
        return out, feats_p[:B, :D], margin
    return out


def _reference_forward(x, params, return_feat=False):
    """Pure-JAX reference mirroring the kernel math (bf16 operands, f32 acc)."""
    B, C, H, W = x.shape
    pooled = jnp.mean(x.reshape(B, C, H * W), axis=-1)

    def mm(a, w):
        return jnp.dot(a.astype(jnp.bfloat16), w.astype(jnp.bfloat16),
                       preferred_element_type=jnp.float32)

    feats = mm(pooled, params["wf"])
    out = mm(feats, params["w1"])
    m = jax.nn.relu(mm(feats, params["w2"]))
    m = jax.nn.relu(mm(m, params["w3"]))
    m = jax.nn.relu(mm(m, params["w4"]))
    m = mm(m, params["w5"])
    margin = jnp.sum(jnp.abs(m), axis=0)
    if return_feat:
        return out, feats, margin
    return out


def init_params(key, in_channels, hashing_dim, num_classes):
    """Deterministic parameter init (PyTorch Linear convention W:(out,in),
    stored pre-transposed to (in,out) for the kernel)."""
    ks = jax.random.split(key, 6)

    def lin(k, d_in, d_out):
        bound = 1.0 / jnp.sqrt(d_in)
        return jax.random.uniform(k, (d_in, d_out), jnp.float32, -bound, bound)

    return {
        "wf": lin(ks[0], in_channels, hashing_dim),   # stand-in backbone proj
        "w1": lin(ks[1], hashing_dim, num_classes),   # linear1
        "w2": lin(ks[2], hashing_dim, 256),           # linear2
        "w3": lin(ks[3], 256, 128),                   # linear3
        "w4": lin(ks[4], 128, 128),                   # linear4
        "w5": lin(ks[5], 128, 3),                     # linear5
    }


if __name__ == "__main__":
    key = jax.random.PRNGKey(0)
    kx, ky, kp = jax.random.split(key, 3)

    B, C, H, W = 2, 4, 16, 16
    hashing_dim, num_classes = 64, 10

    x = jax.random.normal(kx, (B, C, H, W), jnp.float32)
    y = jax.random.randint(ky, (B, 1), 0, 2).astype(jnp.float32)
    params = init_params(kp, C, hashing_dim, num_classes)

    out, feats, margin = hashing_model_forward(x, y, params, return_feat=True)
    jax.block_until_ready((out, feats, margin))

    assert out.shape == (B, num_classes)
    assert feats.shape == (B, hashing_dim)
    assert margin.shape == (3,)

    ref_out, ref_feats, ref_margin = _reference_forward(x, params, return_feat=True)
    assert jnp.allclose(out, ref_out, rtol=2e-2, atol=2e-2)
    assert jnp.allclose(feats, ref_feats, rtol=2e-2, atol=2e-2)
    assert jnp.allclose(margin, ref_margin, rtol=2e-2, atol=2e-2)

    out_only = hashing_model_forward(x, y, params, return_feat=False)
    jax.block_until_ready(out_only)
    assert out_only.shape == (B, num_classes)

    # Larger case with a tiny x-buffer budget to exercise the full 2-D grid
    # (2 batch tiles x 2 HW chunks), the pooled-sum accumulator, and megacore
    # batch partitioning.
    B2 = 16
    x2 = jax.random.normal(jax.random.PRNGKey(1), (B2, C, H, W), jnp.float32)
    y2 = jnp.zeros((B2, 1), jnp.float32)
    out2, feats2, margin2 = hashing_model_forward(
        x2, y2, params, return_feat=True, x_buffer_budget_bytes=48 << 10)
    jax.block_until_ready((out2, feats2, margin2))
    r_out2, r_feats2, r_margin2 = _reference_forward(x2, params, return_feat=True)
    assert out2.shape == (B2, num_classes)
    assert feats2.shape == (B2, hashing_dim)
    assert margin2.shape == (3,)
    assert jnp.allclose(out2, r_out2, rtol=2e-2, atol=2e-2)
    assert jnp.allclose(feats2, r_feats2, rtol=2e-2, atol=2e-2)
    assert jnp.allclose(margin2, r_margin2, rtol=2e-2, atol=2e-2)

    print("KERNEL_OK")
</pallas_src>

<mosaic_0001>
module attributes {stable_mosaic.version = 11 : i64} {
  func.func @_hashing_head_kernel(%arg0: i32, %arg1: i32, %arg2: memref<2x4x256xf32, #tpu.memory_space<vmem>>, %arg3: memref<4x128xbf16, #tpu.memory_space<vmem>>, %arg4: memref<128x384xbf16, #tpu.memory_space<vmem>>, %arg5: memref<256x128xbf16, #tpu.memory_space<vmem>>, %arg6: memref<128x128xbf16, #tpu.memory_space<vmem>>, %arg7: memref<128x128xbf16, #tpu.memory_space<vmem>>, %arg8: memref<2x128xf32, #tpu.memory_space<vmem>>, %arg9: memref<2x128xf32, #tpu.memory_space<vmem>>, %arg10: memref<1x1x128xf32, #tpu.memory_space<vmem>>, %arg11: memref<2x4xf32, #tpu.memory_space<vmem>>) attributes {dimension_semantics = [#tpu.dimension_semantics<parallel>, #tpu.dimension_semantics<arbitrary>], iteration_bounds = array<i64: 1, 1>, scalar_prefetch = 0 : i64, scratch_operands = 1 : i64, tpu.core_type = #tpu.core_type<tc>, window_params = [{transform_indices = @transform_0, window_bounds = array<i64: 2, 4, 256>}, {pipeline_mode = #tpu.pipeline_mode<synchronous>, transform_indices = @transform_1, window_bounds = array<i64: 4, 128>}, {pipeline_mode = #tpu.pipeline_mode<synchronous>, transform_indices = @transform_2, window_bounds = array<i64: 128, 384>}, {pipeline_mode = #tpu.pipeline_mode<synchronous>, transform_indices = @transform_3, window_bounds = array<i64: 256, 128>}, {pipeline_mode = #tpu.pipeline_mode<synchronous>, transform_indices = @transform_4, window_bounds = array<i64: 128, 128>}, {pipeline_mode = #tpu.pipeline_mode<synchronous>, transform_indices = @transform_5, window_bounds = array<i64: 128, 128>}, {transform_indices = @transform_6, window_bounds = array<i64: 2, 128>}, {transform_indices = @transform_7, window_bounds = array<i64: 2, 128>}, {transform_indices = @transform_8, window_bounds = array<i64: 1, 1, 128>}]} {
    %c0 = arith.constant 0 : index
    %c0_0 = arith.constant 0 : index
    %c0_1 = arith.constant 0 : index
    %0 = vector.load %arg2[%c0, %c0_0, %c0_1] : memref<2x4x256xf32, #tpu.memory_space<vmem>>, vector<2x4x256xf32>
    %cst = arith.constant dense<0.000000e+00> : vector<2x4xf32>
    %1 = vector.multi_reduction <add>, %0, %cst [2] : vector<2x4x256xf32> to vector<2x4xf32>
    %c0_i32 = arith.constant 0 : i32
    %2 = arith.cmpi eq, %arg1, %c0_i32 : i32
    %3 = arith.extui %2 : i1 to i32
    %c0_i32_2 = arith.constant 0 : i32
    %4 = arith.cmpi ne, %3, %c0_i32_2 : i32
    scf.if %4 {
      %cst_9 = arith.constant 0.000000e+00 : f32
      %11 = vector.broadcast %cst_9 : f32 to vector<2x4xf32>
      %c0_10 = arith.constant 0 : index
      %c0_11 = arith.constant 0 : index
      %12 = vector.load %arg11[%c0_10, %c0_11] : memref<2x4xf32, #tpu.memory_space<vmem>>, vector<2x4xf32>
      tpu.vector_store %arg11[%c0_10, %c0_11], %11 {strides = array<i32>} : memref<2x4xf32, #tpu.memory_space<vmem>>, vector<2x4xf32>,
    } else {
    }
    %c0_3 = arith.constant 0 : index
    %c0_4 = arith.constant 0 : index
    %5 = vector.load %arg11[%c0_3, %c0_4] : memref<2x4xf32, #tpu.memory_space<vmem>>, vector<2x4xf32>
    %6 = arith.addf %5, %1 : vector<2x4xf32>
    %c0_5 = arith.constant 0 : index
    %c0_6 = arith.constant 0 : index
    %7 = vector.load %arg11[%c0_5, %c0_6] : memref<2x4xf32, #tpu.memory_space<vmem>>, vector<2x4xf32>
    tpu.vector_store %arg11[%c0_5, %c0_6], %6 {strides = array<i32>} : memref<2x4xf32, #tpu.memory_space<vmem>>, vector<2x4xf32>,
    %c0_i32_7 = arith.constant 0 : i32
    %8 = arith.cmpi eq, %arg1, %c0_i32_7 : i32
    %9 = arith.extui %8 : i1 to i32
    %c0_i32_8 = arith.constant 0 : i32
    %10 = arith.cmpi ne, %9, %c0_i32_8 : i32
    scf.if %10 {
      %c0_9 = arith.constant 0 : index
      %c0_10 = arith.constant 0 : index
      %11 = vector.load %arg11[%c0_9, %c0_10] : memref<2x4xf32, #tpu.memory_space<vmem>>, vector<2x4xf32>
      %cst_11 = arith.constant 3.906250e-03 : f32
      %12 = vector.broadcast %cst_11 : f32 to vector<2x4xf32>
      %13 = arith.mulf %11, %12 : vector<2x4xf32>
      %14 = arith.truncf %13 : vector<2x4xf32> to vector<2x4xbf16>
      %c0_12 = arith.constant 0 : index
      %c0_13 = arith.constant 0 : index
      %15 = vector.load %arg3[%c0_12, %c0_13] : memref<4x128xbf16, #tpu.memory_space<vmem>>, vector<4x128xbf16>
      %cst_14 = arith.constant dense<0.000000e+00> : vector<2x128xf32>
      %16 = tpu.matmul %14, %15, %cst_14 {dimension_numbers = #tpu.dot_dimension_numbers<[1], [0], [0], [1], [0, 0, 1, 1], [], []>} : vector<2x4xbf16>, vector<4x128xbf16>, vector<2x128xf32> -> vector<2x128xf32>
      %c0_15 = arith.constant 0 : index
      %c0_16 = arith.constant 0 : index
      %17 = vector.load %arg9[%c0_15, %c0_16] : memref<2x128xf32, #tpu.memory_space<vmem>>, vector<2x128xf32>
      tpu.vector_store %arg9[%c0_15, %c0_16], %16 {strides = array<i32>} : memref<2x128xf32, #tpu.memory_space<vmem>>, vector<2x128xf32>,
      %18 = arith.truncf %16 : vector<2x128xf32> to vector<2x128xbf16>
      %c0_17 = arith.constant 0 : index
      %c0_18 = arith.constant 0 : index
      %19 = vector.load %arg4[%c0_17, %c0_18] : memref<128x384xbf16, #tpu.memory_space<vmem>>, vector<128x384xbf16>
      %cst_19 = arith.constant dense<0.000000e+00> : vector<2x384xf32>
      %20 = tpu.matmul %18, %19, %cst_19 {dimension_numbers = #tpu.dot_dimension_numbers<[1], [0], [0], [1], [0, 0, 1, 1], [], []>} : vector<2x128xbf16>, vector<128x384xbf16>, vector<2x384xf32> -> vector<2x384xf32>
      %21 = vector.extract_strided_slice %20 {offsets = [0, 0], sizes = [2, 128], strides = [1, 1]} : vector<2x384xf32> to vector<2x128xf32>
      %c0_20 = arith.constant 0 : index
      %c0_21 = arith.constant 0 : index
      %22 = vector.load %arg8[%c0_20, %c0_21] : memref<2x128xf32, #tpu.memory_space<vmem>>, vector<2x128xf32>
      tpu.vector_store %arg8[%c0_20, %c0_21], %21 {strides = array<i32>} : memref<2x128xf32, #tpu.memory_space<vmem>>, vector<2x128xf32>,
      %23 = vector.extract_strided_slice %20 {offsets = [0, 128], sizes = [2, 256], strides = [1, 1]} : vector<2x384xf32> to vector<2x256xf32>
      %cst_22 = arith.constant 0.000000e+00 : f32
      %24 = vector.broadcast %cst_22 : f32 to vector<2x256xf32>
      %25 = arith.maximumf %23, %24 : vector<2x256xf32>
      %26 = arith.truncf %25 : vector<2x256xf32> to vector<2x256xbf16>
      %c0_23 = arith.constant 0 : index
      %c0_24 = arith.constant 0 : index
      %27 = vector.load %arg5[%c0_23, %c0_24] : memref<256x128xbf16, #tpu.memory_space<vmem>>, vector<256x128xbf16>
      %cst_25 = arith.constant dense<0.000000e+00> : vector<2x128xf32>
      %28 = tpu.matmul %26, %27, %cst_25 {dimension_numbers = #tpu.dot_dimension_numbers<[1], [0], [0], [1], [0, 0, 1, 1], [], []>} : vector<2x256xbf16>, vector<256x128xbf16>, vector<2x128xf32> -> vector<2x128xf32>
      %cst_26 = arith.constant 0.000000e+00 : f32
      %29 = vector.broadcast %cst_26 : f32 to vector<2x128xf32>
      %30 = arith.maximumf %28, %29 : vector<2x128xf32>
      %31 = arith.truncf %30 : vector<2x128xf32> to vector<2x128xbf16>
      %c0_27 = arith.constant 0 : index
      %c0_28 = arith.constant 0 : index
      %32 = vector.load %arg6[%c0_27, %c0_28] : memref<128x128xbf16, #tpu.memory_space<vmem>>, vector<128x128xbf16>
      %cst_29 = arith.constant dense<0.000000e+00> : vector<2x128xf32>
      %33 = tpu.matmul %31, %32, %cst_29 {dimension_numbers = #tpu.dot_dimension_numbers<[1], [0], [0], [1], [0, 0, 1, 1], [], []>} : vector<2x128xbf16>, vector<128x128xbf16>, vector<2x128xf32> -> vector<2x128xf32>
      %cst_30 = arith.constant 0.000000e+00 : f32
      %34 = vector.broadcast %cst_30 : f32 to vector<2x128xf32>
      %35 = arith.maximumf %33, %34 : vector<2x128xf32>
      %36 = arith.truncf %35 : vector<2x128xf32> to vector<2x128xbf16>
      %c0_31 = arith.constant 0 : index
      %c0_32 = arith.constant 0 : index
      %37 = vector.load %arg7[%c0_31, %c0_32] : memref<128x128xbf16, #tpu.memory_space<vmem>>, vector<128x128xbf16>
      %cst_33 = arith.constant dense<0.000000e+00> : vector<2x128xf32>
      %38 = tpu.matmul %36, %37, %cst_33 {dimension_numbers = #tpu.dot_dimension_numbers<[1], [0], [0], [1], [0, 0, 1, 1], [], []>} : vector<2x128xbf16>, vector<128x128xbf16>, vector<2x128xf32> -> vector<2x128xf32>
      %39 = math.absf %38 : vector<2x128xf32>
      %cst_34 = arith.constant dense<0.000000e+00> : vector<128xf32>
      %40 = vector.multi_reduction <add>, %39, %cst_34 [0] : vector<2x128xf32> to vector<128xf32>
      %41 = vector.shape_cast %40 : vector<128xf32> to vector<1x128xf32>
      %42 = vector.shape_cast %41 : vector<1x128xf32> to vector<1x1x128xf32>
      %c0_35 = arith.constant 0 : index
      %c0_36 = arith.constant 0 : index
      %c0_37 = arith.constant 0 : index
      %43 = vector.load %arg10[%c0_35, %c0_36, %c0_37] : memref<1x1x128xf32, #tpu.memory_space<vmem>>, vector<1x1x128xf32>
      tpu.vector_store %arg10[%c0_35, %c0_36, %c0_37], %42 {strides = array<i32>} : memref<1x1x128xf32, #tpu.memory_space<vmem>>, vector<1x1x128xf32>,
    } else {
    }
    return
  }
  func.func @transform_0(%arg0: i32, %arg1: i32) -> (i32, i32, i32) {
    %c0_i32 = arith.constant 0 : i32
    %c0_i32_0 = arith.constant 0 : i32
    return %arg0, %c0_i32, %arg1 : i32, i32, i32
  }
  func.func @transform_1(%arg0: i32, %arg1: i32) -> (i32, i32) {
    %c0_i32 = arith.constant 0 : i32
    %c0_i32_0 = arith.constant 0 : i32
    %c0_i32_1 = arith.constant 0 : i32
    return %c0_i32, %c0_i32_0 : i32, i32
  }
  func.func @transform_2(%arg0: i32, %arg1: i32) -> (i32, i32) {
    %c0_i32 = arith.constant 0 : i32
    %c0_i32_0 = arith.constant 0 : i32
    %c0_i32_1 = arith.constant 0 : i32
    return %c0_i32, %c0_i32_0 : i32, i32
  }
  func.func @transform_3(%arg0: i32, %arg1: i32) -> (i32, i32) {
    %c0_i32 = arith.constant 0 : i32
    %c0_i32_0 = arith.constant 0 : i32
    %c0_i32_1 = arith.constant 0 : i32
    return %c0_i32, %c0_i32_0 : i32, i32
  }
  func.func @transform_4(%arg0: i32, %arg1: i32) -> (i32, i32) {
    %c0_i32 = arith.constant 0 : i32
    %c0_i32_0 = arith.constant 0 : i32
    %c0_i32_1 = arith.constant 0 : i32
    return %c0_i32, %c0_i32_0 : i32, i32
  }
  func.func @transform_5(%arg0: i32, %arg1: i32) -> (i32, i32) {
    %c0_i32 = arith.constant 0 : i32
    %c0_i32_0 = arith.constant 0 : i32
    %c0_i32_1 = arith.constant 0 : i32
    return %c0_i32, %c0_i32_0 : i32, i32
  }
  func.func @transform_6(%arg0: i32, %arg1: i32) -> (i32, i32) {
    %c0_i32 = arith.constant 0 : i32
    %c0_i32_0 = arith.constant 0 : i32
    return %arg0, %c0_i32 : i32, i32
  }
  func.func @transform_7(%arg0: i32, %arg1: i32) -> (i32, i32) {
    %c0_i32 = arith.constant 0 : i32
    %c0_i32_0 = arith.constant 0 : i32
    return %arg0, %c0_i32 : i32, i32
  }
  func.func @transform_8(%arg0: i32, %arg1: i32) -> (i32, i32, i32) {
    %c0_i32 = arith.constant 0 : i32
    %c0_i32_0 = arith.constant 0 : i32
    %c0_i32_1 = arith.constant 0 : i32
    return %arg0, %c0_i32, %c0_i32_0 : i32, i32, i32
  }
}

</mosaic_0001>

<llo_original>
// kernel: hashing_model_forward.1
$region0: #{hashing_model_forward.1}
  #allocation0 [shape = 'u32[]', space=smem, size = 0x4, offset = 0x4, fixed_abs, tag = 'smem constant byte address 0x4 - core index']
  #allocation1 [shape = 'u32[144,128]{1,0:T(1,128)}', space=vmem, size = 0x12000, scoped, tag = 'internal scratch']
  #allocation2 [shape = 'f32[2,4]{1,0:T(2,128)}', space=vmem, size = 0x400, scoped, tag = 'scratch operand']
  %s0 = inlined_call_operand.vmem [shape: f32[2,4,256], index: 0, kind: input, shape index: {}]
  %s1 = inlined_call_operand.vmem [shape: bf16[4,128], index: 1, kind: input, shape index: {}]
  %s2 = inlined_call_operand.vmem [shape: bf16[128,384], index: 2, kind: input, shape index: {}]
  %s3 = inlined_call_operand.vmem [shape: bf16[256,128], index: 3, kind: input, shape index: {}]
  %s4 = inlined_call_operand.vmem [shape: bf16[128,128], index: 4, kind: input, shape index: {}]
  %s5 = inlined_call_operand.vmem [shape: bf16[128,128], index: 5, kind: input, shape index: {}]
  %s6 = inlined_call_operand.hbm [shape: f32[2,128], index: 6, kind: output, shape index: {0}]
  %s7 = inlined_call_operand.hbm [shape: f32[2,128], index: 7, kind: output, shape index: {1}]
  %s8 = inlined_call_operand.vmem [shape: f32[1,1,128], index: 8, kind: output, shape index: {2}]
  %9 = xla_tuple %s6, %s7, %s8
  %s10 = sld [smem:[#allocation0]]
  $region58: #{hashing_model_forward.1} parent=0
    _
  %s12 = ssub.s32 1, %s10
  %s13 = scalar_select 0, %s12, %s10
  $region1: #{hashing_model_forward.1} parent=0
    #allocation3 [shape = 'u8[1024]{0}', space=vmem, size = 0x400, scoped, tag = 'output window, operand 0, single buffered']
    #allocation4 [shape = 's32[1]{0}', space=sflag, size = 0x4, scoped, tag = 'scoped memory for hashing_model_forward.1']
    #allocation5 [shape = 'u8[1024]{0}', space=vmem, size = 0x400, scoped, tag = 'output window, operand 1, single buffered']
    #allocation6 [shape = 's32[1]{0}', space=sflag, size = 0x4, scoped, tag = 'scoped memory for hashing_model_forward.1']
    %14 = vsyncpa [#allocation4], 0
    %15 = vsyncpa [#allocation6], 0
    // Predicated region
    $region2: #{hashing_model_forward.1} parent=1 // pred_check
      _
    $region3: #{hashing_model_forward.1} parent=1 // pred_check_branch
      %17 = sbr.rel (0) target = $region5
    $region4: #{hashing_model_forward.1} parent=1 // pred_region
      _
    $region5: #{hashing_model_forward.1} parent=1 // pred_fallthru
      _
    // Predicated region
    $region6: #{hashing_model_forward.1} parent=1 // pred_check
      _
    $region7: #{hashing_model_forward.1} parent=1 // pred_check_branch
      %19 = sbr.rel (0) target = $region9
    $region8: #{hashing_model_forward.1} parent=1 // pred_region
      _
    $region9: #{hashing_model_forward.1} parent=1 // pred_fallthru
      _
    // Predicated region
    $region10: #{hashing_model_forward.1} parent=1 // pred_check
      _
    $region11: #{hashing_model_forward.1} parent=1 // pred_check_branch
      %21 = sbr.rel (0) target = $region13
    $region12: #{hashing_model_forward.1} parent=1 // pred_region
      _
    $region13: #{hashing_model_forward.1} parent=1 // pred_fallthru
      _
    // Predicated region
    $region14: #{hashing_model_forward.1} parent=1 // pred_check
      _
    $region15: #{hashing_model_forward.1} parent=1 // pred_check_branch
      %23 = sbr.rel (0) target = $region17
    $region16: #{hashing_model_forward.1} parent=1 // pred_region
      _
    $region17: #{hashing_model_forward.1} parent=1 // pred_fallthru
      _
    // Predicated region
    $region18: #{hashing_model_forward.1} parent=1 // pred_check
      _
    $region19: #{hashing_model_forward.1} parent=1 // pred_check_branch
      %25 = sbr.rel (0) target = $region21
    $region20: #{hashing_model_forward.1} parent=1 // pred_region
      _
    $region21: #{hashing_model_forward.1} parent=1 // pred_fallthru
      _
    // Predicated region
    $region22: #{hashing_model_forward.1} parent=1 // pred_check
      _
    $region23: #{hashing_model_forward.1} parent=1 // pred_check_branch
      %27 = sbr.rel (0) target = $region25
    $region24: #{hashing_model_forward.1} parent=1 // pred_region
      _
    $region25: #{hashing_model_forward.1} parent=1 // pred_fallthru
      _
    %v29 = vld [vmem:[%s0] sm:$0xff]
    %v30 = vld [vmem:[%s0 + $0x8] sm:$0xff]
    %v33 = vcombine.high %v29, %v29
    %v34 = vcombine.high %v30, %v30
    %vm37 = vcmask 1043456
    %v38 = vsel %vm37, %v29, 0.0
    %v39 = vsel %vm37, %v33, 0.0
    %v40 = vadd.f32 %v38, %v39
    %41 = vadd.xlane.f32.xlu0 %v40
    %v42 = vpop.xlane.xlu0 %41
    %v43 = vsel %vm37, %v30, 0.0
    %v44 = vsel %vm37, %v34, 0.0
    %v45 = vadd.f32 %v43, %v44
    %46 = vadd.xlane.f32.xlu0 %v45
    %v47 = vpop.xlane.xlu0 %46
    %p48 = scmp.eq.s32.totalorder 0, 0
    // Predicated region
    $region26: #{hashing_model_forward.1} parent=1 // pred_check
      %p49 = pneg %p48
    $region27: #{hashing_model_forward.1} parent=1 // pred_check_branch
      %51 = sbr.rel (%p49) target = $region29
    $region28: #{hashing_model_forward.1} parent=1 // pred_region
      %vm52 = vcmask 25600
      %53 = vst.msk [vmem:[#allocation2] sm:$0x3] %vm52, 0.0
    $region29: #{hashing_model_forward.1} parent=1 // pred_fallthru
      _
    %v54 = vld [vmem:[#allocation2] sm:$0x3]
    %v57 = vlaneseq
    %v58 = vand.u32 %v57, 127
    %v59 = vlaneseq
    %v60 = vshrl.u32 %v59, 7
    %v61 = vsub.s32 %v58, %v60
    %v62 = vrot.slane %v42, %v61
    %v63 = vlaneseq
    %v64 = vshrl.u32 %v63, 7
    %v65 = vsub.s32 %v58, %v64
    %v66 = vrot.slane %v47, %v65
    %vm67 = vcmask 1041409
    %v68 = vsel %vm67, %v66, %v62
    %v70 = vadd.f32 %v54, %v68
    %vm71 = vcmask 25600
    %72 = vst.msk [vmem:[#allocation2] sm:$0x3] %vm71, %v70
    // Predicated region
    $region30: #{hashing_model_forward.1} parent=1 // pred_check
      %p73 = pneg %p48
    $region31: #{hashing_model_forward.1} parent=1 // pred_check_branch
      %75 = sbr.rel (%p73) target = $region33
    $region32: #{hashing_model_forward.1} parent=1 // pred_region
      %v76 = vld [vmem:[#allocation2] sm:$0x3]
      %v77 = vmul.f32 %v76, 0.00390625
      %v78 = vpack.c.bf16 %v77, %v77
      %v79 = vld [vmem:[%s1] sm:$0x3]
      %vm80 = vcmask 31744
      %v82 = vsel %vm80, %v78, 0
      %vm84 = vcmask 1041408
      %v86 = vsel %vm84, %v79, 0
      %88 = vmatprep.subr.bf16.mxu0 0
      %89 = vmatpush1.bf16.msra.mxu0 %v86
      %90 = vmatprep.subr.bf16.mxu0 0
      %91 = vmatpush1.bf16.msra.mxu0 0
      %92 = vmatprep.subr.bf16.mxu0 0
      %93 = vmatpush1.bf16.msra.mxu0 0
      %94 = vmatprep.subr.bf16.mxu0 0
      %95 = vmatpush1.bf16.msra.mxu0 0
      %96 = vmatprep.subr.bf16.mxu0 0
      %97 = vmatpush1.bf16.msra.mxu0 0
      %98 = vmatprep.subr.bf16.mxu0 0
      %99 = vmatpush1.bf16.msra.mxu0 0
      %100 = vmatprep.subr.bf16.mxu0 0
      %101 = vmatpush1.bf16.msra.mxu0 0
      %102 = vmatprep.subr.bf16.mxu0 0
      %103 = vmatpush1.bf16.msra.mxu0 0
      %104 = vmatprep.subr.bf16.mxu0 0
      %105 = vmatpush1.bf16.msra.mxu0 0
      %106 = vmatprep.subr.bf16.mxu0 0
      %107 = vmatpush1.bf16.msra.mxu0 0
      %108 = vmatprep.subr.bf16.mxu0 0
      %109 = vmatpush1.bf16.msra.mxu0 0
      %110 = vmatprep.subr.bf16.mxu0 0
      %111 = vmatpush1.bf16.msra.mxu0 0
      %112 = vmatprep.subr.bf16.mxu0 0
      %113 = vmatpush1.bf16.msra.mxu0 0
      %114 = vmatprep.subr.bf16.mxu0 0
      %115 = vmatpush1.bf16.msra.mxu0 0
      %116 = vmatprep.subr.bf16.mxu0 0
      %117 = vmatpush1.bf16.msra.mxu0 0
      %118 = vmatprep.subr.bf16.mxu0 0
      %119 = vmatpush1.bf16.msra.mxu0 0
      %120 = vmatprep.mubr.bf16.mxu0 0
      %121 = vmatmul.mubr.bf16.gmra.mrb[0].mxu0 %v82
      %v122 = vpop.f32.mrb[0].mxu0
      %v123 = vadd.f32 0.0, %v122
      %v124 = vpop.f32.mrb[0].mxu0
      %v125 = vpop.f32.mrb[0].mxu0
      %v126 = vpop.f32.mrb[0].mxu0
      %127 = vdwg.mxu0
      %128 = vst [vmem:[#allocation5] sm:$0x3] %v123
      %v129 = vpack.c.bf16 %v123, %v123
      %v130 = vld [vmem:[%s2] sm:$0xff]
      %v131 = vld [vmem:[%s2 + $0x8] sm:$0xf]
      %v132 = vld [vmem:[%s2 + $0xc] sm:$0xff]
      %v133 = vld [vmem:[%s2 + $0x14] sm:$0xf]
      %v134 = vld [vmem:[%s2 + $0x18] sm:$0xff]
      %v135 = vld [vmem:[%s2 + $0x20] sm:$0xf]
      %v136 = vld [vmem:[%s2 + $0x24] sm:$0xff]
      %v137 = vld [vmem:[%s2 + $0x2c] sm:$0xf]
      %v138 = vld [vmem:[%s2 + $0x30] sm:$0xff]
      %v139 = vld [vmem:[%s2 + $0x38] sm:$0xf]
      %v140 = vld [vmem:[%s2 + $0x3c] sm:$0xff]
      %v141 = vld [vmem:[%s2 + $0x44] sm:$0xf]
      %v142 = vld [vmem:[%s2 + $0x48] sm:$0xff]
      %v143 = vld [vmem:[%s2 + $0x50] sm:$0xf]
      %v144 = vld [vmem:[%s2 + $0x54] sm:$0xff]
      %v145 = vld [vmem:[%s2 + $0x5c] sm:$0xf]
      %v146 = vld [vmem:[%s2 + $0x60] sm:$0xff]
      %v147 = vld [vmem:[%s2 + $0x68] sm:$0xf]
      %v148 = vld [vmem:[%s2 + $0x6c] sm:$0xff]
      %v149 = vld [vmem:[%s2 + $0x74] sm:$0xf]
      %v150 = vld [vmem:[%s2 + $0x78] sm:$0xff]
      %v151 = vld [vmem:[%s2 + $0x80] sm:$0xf]
      %v152 = vld [vmem:[%s2 + $0x84] sm:$0xff]
      %v153 = vld [vmem:[%s2 + $0x8c] sm:$0xf]
      %v154 = vld [vmem:[%s2 + $0x90] sm:$0xff]
      %v155 = vld [vmem:[%s2 + $0x98] sm:$0xf]
      %v156 = vld [vmem:[%s2 + $0x9c] sm:$0xff]
      %v157 = vld [vmem:[%s2 + $0xa4] sm:$0xf]
      %v158 = vld [vmem:[%s2 + $0xa8] sm:$0xff]
      %v159 = vld [vmem:[%s2 + $0xb0] sm:$0xf]
      %v160 = vld [vmem:[%s2 + $0xb4] sm:$0xff]
      %v161 = vld [vmem:[%s2 + $0xbc] sm:$0xf]
      %v194 = vunpack.c.l.b16 %v130
      %v195 = vunpack.c.h.b16 %v130
      %v196 = vunpack.c.l.b16 %v131
      %v197 = vunpack.c.l.b16 %v132
      %v198 = vunpack.c.h.b16 %v132
      %v199 = vunpack.c.l.b16 %v133
      %v200 = vunpack.c.l.b16 %v134
      %v201 = vunpack.c.h.b16 %v134
      %v202 = vunpack.c.l.b16 %v135
      %v203 = vunpack.c.l.b16 %v136
      %v204 = vunpack.c.h.b16 %v136
      %v205 = vunpack.c.l.b16 %v137
      %v206 = vunpack.c.l.b16 %v138
      %v207 = vunpack.c.h.b16 %v138
      %v208 = vunpack.c.l.b16 %v139
      %v209 = vunpack.c.l.b16 %v140
      %v210 = vunpack.c.h.b16 %v140
      %v211 = vunpack.c.l.b16 %v141
      %v212 = vunpack.c.l.b16 %v142
      %v213 = vunpack.c.h.b16 %v142
      %v214 = vunpack.c.l.b16 %v143
      %v215 = vunpack.c.l.b16 %v144
      %v216 = vunpack.c.h.b16 %v144
      %v217 = vunpack.c.l.b16 %v145
      %v218 = vunpack.c.l.b16 %v146
      %v219 = vunpack.c.h.b16 %v146
      %v220 = vunpack.c.l.b16 %v147
      %v221 = vunpack.c.l.b16 %v148
      %v222 = vunpack.c.h.b16 %v148
      %v223 = vunpack.c.l.b16 %v149
      %v224 = vunpack.c.l.b16 %v150
      %v225 = vunpack.c.h.b16 %v150
      %v226 = vunpack.c.l.b16 %v151
      %v227 = vunpack.c.l.b16 %v152
      %v228 = vunpack.c.h.b16 %v152
      %v229 = vunpack.c.l.b16 %v153
      %v230 = vunpack.c.l.b16 %v154
      %v231 = vunpack.c.h.b16 %v154
      %v232 = vunpack.c.l.b16 %v155
      %v233 = vunpack.c.l.b16 %v156
      %v234 = vunpack.c.h.b16 %v156
      %v235 = vunpack.c.l.b16 %v157
      %v236 = vunpack.c.l.b16 %v158
      %v237 = vunpack.c.h.b16 %v158
      %v238 = vunpack.c.l.b16 %v159
      %v239 = vunpack.c.l.b16 %v160
      %v240 = vunpack.c.h.b16 %v160
      %v241 = vunpack.c.l.b16 %v161
      %v242 = vpack.c.b16 %v197, %v194
      %v243 = vpack.c.b16 %v198, %v195
      %v244 = vpack.c.b16 %v199, %v196
      %v245 = vpack.c.b16 %v203, %v200
      %v246 = vpack.c.b16 %v204, %v201
      %v247 = vpack.c.b16 %v205, %v202
      %v248 = vpack.c.b16 %v209, %v206
      %v249 = vpack.c.b16 %v210, %v207
      %v250 = vpack.c.b16 %v211, %v208
      %v251 = vpack.c.b16 %v215, %v212
      %v252 = vpack.c.b16 %v216, %v213
      %v253 = vpack.c.b16 %v217, %v214
      %v254 = vpack.c.b16 %v221, %v218
      %v255 = vpack.c.b16 %v222, %v219
      %v256 = vpack.c.b16 %v223, %v220
      %v257 = vpack.c.b16 %v227, %v224
      %v258 = vpack.c.b16 %v228, %v225
      %v259 = vpack.c.b16 %v229, %v226
      %v260 = vpack.c.b16 %v233, %v230
      %v261 = vpack.c.b16 %v234, %v231
      %v262 = vpack.c.b16 %v235, %v232
      %v263 = vpack.c.b16 %v239, %v236
      %v264 = vpack.c.b16 %v240, %v237
      %v265 = vpack.c.b16 %v241, %v238
      %290 = vmatprep.subr.bf16.mxu0 %v243
      %291 = vmatpush1.bf16.msra.mxu0 %v242
      %292 = vmatprep.subr.bf16.mxu0 %v246
      %293 = vmatpush1.bf16.msra.mxu0 %v245
      %294 = vmatprep.subr.bf16.mxu0 %v249
      %295 = vmatpush1.bf16.msra.mxu0 %v248
      %296 = vmatprep.subr.bf16.mxu0 %v252
      %297 = vmatpush1.bf16.msra.mxu0 %v251
      %298 = vmatprep.subr.bf16.mxu0 %v255
      %299 = vmatpush1.bf16.msra.mxu0 %v254
      %300 = vmatprep.subr.bf16.mxu0 %v258
      %301 = vmatpush1.bf16.msra.mxu0 %v257
      %302 = vmatprep.subr.bf16.mxu0 %v261
      %303 = vmatpush1.bf16.msra.mxu0 %v260
      %304 = vmatprep.subr.bf16.mxu0 %v264
      %305 = vmatpush1.bf16.msra.mxu0 %v263
      %306 = vmatprep.subr.bf16.mxu0 0
      %307 = vmatpush1.bf16.msra.mxu0 0
      %308 = vmatprep.subr.bf16.mxu0 0
      %309 = vmatpush1.bf16.msra.mxu0 0
      %310 = vmatprep.subr.bf16.mxu0 0
      %311 = vmatpush1.bf16.msra.mxu0 0
      %312 = vmatprep.subr.bf16.mxu0 0
      %313 = vmatpush1.bf16.msra.mxu0 0
      %314 = vmatprep.subr.bf16.mxu0 0
      %315 = vmatpush1.bf16.msra.mxu0 0
      %316 = vmatprep.subr.bf16.mxu0 0
      %317 = vmatpush1.bf16.msra.mxu0 0
      %318 = vmatprep.subr.bf16.mxu0 0
      %319 = vmatpush1.bf16.msra.mxu0 0
      %320 = vmatprep.subr.bf16.mxu0 0
      %321 = vmatpush1.bf16.msra.mxu0 0
      %322 = vmatprep.mubr.bf16.mxu0 0
      %323 = vmatmul.mubr.bf16.gmra.mrb[0].mxu0 %v129
      %v324 = vpop.f32.mrb[0].mxu0
      %v325 = vadd.f32 0.0, %v324
      %v326 = vpop.f32.mrb[0].mxu0
      %v327 = vadd.f32 0.0, %v326
      %v328 = vpop.f32.mrb[0].mxu0
      %v329 = vpop.f32.mrb[0].mxu0
      %330 = vdwg.mxu0
      %331 = vmatprep.subr.bf16.mxu0 0
      %332 = vmatpush1.bf16.msra.mxu0 %v244
      %333 = vmatprep.subr.bf16.mxu0 0
      %334 = vmatpush1.bf16.msra.mxu0 %v247
      %335 = vmatprep.subr.bf16.mxu0 0
      %336 = vmatpush1.bf16.msra.mxu0 %v250
      %337 = vmatprep.subr.bf16.mxu0 0
      %338 = vmatpush1.bf16.msra.mxu0 %v253
      %339 = vmatprep.subr.bf16.mxu0 0
      %340 = vmatpush1.bf16.msra.mxu0 %v256
      %341 = vmatprep.subr.bf16.mxu0 0
      %342 = vmatpush1.bf16.msra.mxu0 %v259
      %343 = vmatprep.subr.bf16.mxu0 0
      %344 = vmatpush1.bf16.msra.mxu0 %v262
      %345 = vmatprep.subr.bf16.mxu0 0
      %346 = vmatpush1.bf16.msra.mxu0 %v265
      %347 = vmatprep.subr.bf16.mxu0 0
      %348 = vmatpush1.bf16.msra.mxu0 0
      %349 = vmatprep.subr.bf16.mxu0 0
      %350 = vmatpush1.bf16.msra.mxu0 0
      %351 = vmatprep.subr.bf16.mxu0 0
      %352 = vmatpush1.bf16.msra.mxu0 0
      %353 = vmatprep.subr.bf16.mxu0 0
      %354 = vmatpush1.bf16.msra.mxu0 0
      %355 = vmatprep.subr.bf16.mxu0 0
      %356 = vmatpush1.bf16.msra.mxu0 0
      %357 = vmatprep.subr.bf16.mxu0 0
      %358 = vmatpush1.bf16.msra.mxu0 0
      %359 = vmatprep.subr.bf16.mxu0 0
      %360 = vmatpush1.bf16.msra.mxu0 0
      %361 = vmatprep.subr.bf16.mxu0 0
      %362 = vmatpush1.bf16.msra.mxu0 0
      %363 = vmatprep.mubr.bf16.mxu0 0
      %364 = vmatmul.mubr.bf16.gmra.mrb[0].mxu0 %v129
      %v365 = vpop.f32.mrb[0].mxu0
      %v366 = vadd.f32 0.0, %v365
      %v367 = vpop.f32.mrb[0].mxu0
      %v368 = vpop.f32.mrb[0].mxu0
      %v369 = vpop.f32.mrb[0].mxu0
      %370 = vdwg.mxu0
      %371 = vst [vmem:[#allocation3] sm:$0x3] %v325
      %v372 = vmax.f32 %v327, 0.0
      %v373 = vmax.f32 %v366, 0.0
      %v374 = vpack.c.bf16 %v372, %v372
      %v375 = vpack.c.bf16 %v373, %v373
      %v376 = vld [vmem:[%s3] sm:$0xf]
      %v377 = vld [vmem:[%s3 + $0x4] sm:$0xf]
      %v378 = vld [vmem:[%s3 + $0x8] sm:$0xf]
      %v379 = vld [vmem:[%s3 + $0xc] sm:$0xf]
      %v380 = vld [vmem:[%s3 + $0x10] sm:$0xf]
      %v381 = vld [vmem:[%s3 + $0x14] sm:$0xf]
      %v382 = vld [vmem:[%s3 + $0x18] sm:$0xf]
      %v383 = vld [vmem:[%s3 + $0x1c] sm:$0xf]
      %v384 = vld [vmem:[%s3 + $0x20] sm:$0xf]
      %v385 = vld [vmem:[%s3 + $0x24] sm:$0xf]
      %v386 = vld [vmem:[%s3 + $0x28] sm:$0xf]
      %v387 = vld [vmem:[%s3 + $0x2c] sm:$0xf]
      %v388 = vld [vmem:[%s3 + $0x30] sm:$0xf]
      %v389 = vld [vmem:[%s3 + $0x34] sm:$0xf]
      %v390 = vld [vmem:[%s3 + $0x38] sm:$0xf]
      %v391 = vld [vmem:[%s3 + $0x3c] sm:$0xf]
      %v392 = vld [vmem:[%s3 + $0x40] sm:$0xf]
      %v393 = vld [vmem:[%s3 + $0x44] sm:$0xf]
      %v394 = vld [vmem:[%s3 + $0x48] sm:$0xf]
      %v395 = vld [vmem:[%s3 + $0x4c] sm:$0xf]
      %v396 = vld [vmem:[%s3 + $0x50] sm:$0xf]
      %v397 = vld [vmem:[%s3 + $0x54] sm:$0xf]
      %v398 = vld [vmem:[%s3 + $0x58] sm:$0xf]
      %v399 = vld [vmem:[%s3 + $0x5c] sm:$0xf]
      %v400 = vld [vmem:[%s3 + $0x60] sm:$0xf]
      %v401 = vld [vmem:[%s3 + $0x64] sm:$0xf]
      %v402 = vld [vmem:[%s3 + $0x68] sm:$0xf]
      %v403 = vld [vmem:[%s3 + $0x6c] sm:$0xf]
      %v404 = vld [vmem:[%s3 + $0x70] sm:$0xf]
      %v405 = vld [vmem:[%s3 + $0x74] sm:$0xf]
      %v406 = vld [vmem:[%s3 + $0x78] sm:$0xf]
      %v407 = vld [vmem:[%s3 + $0x7c] sm:$0xf]
      %v440 = vunpack.c.l.b16 %v376
      %v441 = vunpack.c.l.b16 %v377
      %v442 = vunpack.c.l.b16 %v378
      %v443 = vunpack.c.l.b16 %v379
      %v444 = vunpack.c.l.b16 %v380
      %v445 = vunpack.c.l.b16 %v381
      %v446 = vunpack.c.l.b16 %v382
      %v447 = vunpack.c.l.b16 %v383
      %v448 = vunpack.c.l.b16 %v384
      %v449 = vunpack.c.l.b16 %v385
      %v450 = vunpack.c.l.b16 %v386
      %v451 = vunpack.c.l.b16 %v387
      %v452 = vunpack.c.l.b16 %v388
      %v453 = vunpack.c.l.b16 %v389
      %v454 = vunpack.c.l.b16 %v390
      %v455 = vunpack.c.l.b16 %v391
      %v456 = vunpack.c.l.b16 %v392
      %v457 = vunpack.c.l.b16 %v393
      %v458 = vunpack.c.l.b16 %v394
      %v459 = vunpack.c.l.b16 %v395
      %v460 = vunpack.c.l.b16 %v396
      %v461 = vunpack.c.l.b16 %v397
      %v462 = vunpack.c.l.b16 %v398
      %v463 = vunpack.c.l.b16 %v399
      %v464 = vunpack.c.l.b16 %v400
      %v465 = vunpack.c.l.b16 %v401
      %v466 = vunpack.c.l.b16 %v402
      %v467 = vunpack.c.l.b16 %v403
      %v468 = vunpack.c.l.b16 %v404
      %v469 = vunpack.c.l.b16 %v405
      %v470 = vunpack.c.l.b16 %v406
      %v471 = vunpack.c.l.b16 %v407
      %v472 = vpack.c.b16 %v441, %v440
      %v473 = vpack.c.b16 %v443, %v442
      %v474 = vpack.c.b16 %v445, %v444
      %v475 = vpack.c.b16 %v447, %v446
      %v476 = vpack.c.b16 %v449, %v448
      %v477 = vpack.c.b16 %v451, %v450
      %v478 = vpack.c.b16 %v453, %v452
      %v479 = vpack.c.b16 %v455, %v454
      %v480 = vpack.c.b16 %v457, %v456
      %v481 = vpack.c.b16 %v459, %v458
      %v482 = vpack.c.b16 %v461, %v460
      %v483 = vpack.c.b16 %v463, %v462
      %v484 = vpack.c.b16 %v465, %v464
      %v485 = vpack.c.b16 %v467, %v466
      %v486 = vpack.c.b16 %v469, %v468
      %v487 = vpack.c.b16 %v471, %v470
      %504 = vmatprep.subr.bf16.mxu0 0
      %505 = vmatpush1.bf16.msra.mxu0 %v472
      %506 = vmatprep.subr.bf16.mxu0 0
      %507 = vmatpush1.bf16.msra.mxu0 %v473
      %508 = vmatprep.subr.bf16.mxu0 0
      %509 = vmatpush1.bf16.msra.mxu0 %v474
      %510 = vmatprep.subr.bf16.mxu0 0
      %511 = vmatpush1.bf16.msra.mxu0 %v475
      %512 = vmatprep.subr.bf16.mxu0 0
      %513 = vmatpush1.bf16.msra.mxu0 %v476
      %514 = vmatprep.subr.bf16.mxu0 0
      %515 = vmatpush1.bf16.msra.mxu0 %v477
      %516 = vmatprep.subr.bf16.mxu0 0
      %517 = vmatpush1.bf16.msra.mxu0 %v478
      %518 = vmatprep.subr.bf16.mxu0 0
      %519 = vmatpush1.bf16.msra.mxu0 %v479
      %520 = vmatprep.subr.bf16.mxu0 0
      %521 = vmatpush1.bf16.msra.mxu0 %v480
      %522 = vmatprep.subr.bf16.mxu0 0
      %523 = vmatpush1.bf16.msra.mxu0 %v481
      %524 = vmatprep.subr.bf16.mxu0 0
      %525 = vmatpush1.bf16.msra.mxu0 %v482
      %526 = vmatprep.subr.bf16.mxu0 0
      %527 = vmatpush1.bf16.msra.mxu0 %v483
      %528 = vmatprep.subr.bf16.mxu0 0
      %529 = vmatpush1.bf16.msra.mxu0 %v484
      %530 = vmatprep.subr.bf16.mxu0 0
      %531 = vmatpush1.bf16.msra.mxu0 %v485
      %532 = vmatprep.subr.bf16.mxu0 0
      %533 = vmatpush1.bf16.msra.mxu0 %v486
      %534 = vmatprep.subr.bf16.mxu0 0
      %535 = vmatpush1.bf16.msra.mxu0 %v487
      %536 = vmatprep.mubr.bf16.mxu0 %v375
      %537 = vmatmul.mubr.bf16.gmra.mrb[0].mxu0 %v374
      %v538 = vpop.f32.mrb[0].mxu0
      %v539 = vadd.f32 0.0, %v538
      %v540 = vpop.f32.mrb[0].mxu0
      %v541 = vpop.f32.mrb[0].mxu0
      %v542 = vpop.f32.mrb[0].mxu0
      %543 = vdwg.mxu0
      %v544 = vmax.f32 %v539, 0.0
      %v545 = vpack.c.bf16 %v544, %v544
      %v546 = vld [vmem:[%s4] sm:$0xf]
      %v547 = vld [vmem:[%s4 + $0x4] sm:$0xf]
      %v548 = vld [vmem:[%s4 + $0x8] sm:$0xf]
      %v549 = vld [vmem:[%s4 + $0xc] sm:$0xf]
      %v550 = vld [vmem:[%s4 + $0x10] sm:$0xf]
      %v551 = vld [vmem:[%s4 + $0x14] sm:$0xf]
      %v552 = vld [vmem:[%s4 + $0x18] sm:$0xf]
      %v553 = vld [vmem:[%s4 + $0x1c] sm:$0xf]
      %v554 = vld [vmem:[%s4 + $0x20] sm:$0xf]
      %v555 = vld [vmem:[%s4 + $0x24] sm:$0xf]
      %v556 = vld [vmem:[%s4 + $0x28] sm:$0xf]
      %v557 = vld [vmem:[%s4 + $0x2c] sm:$0xf]
      %v558 = vld [vmem:[%s4 + $0x30] sm:$0xf]
      %v559 = vld [vmem:[%s4 + $0x34] sm:$0xf]
      %v560 = vld [vmem:[%s4 + $0x38] sm:$0xf]
      %v561 = vld [vmem:[%s4 + $0x3c] sm:$0xf]
      %v578 = vunpack.c.l.b16 %v546
      %v579 = vunpack.c.l.b16 %v547
      %v580 = vunpack.c.l.b16 %v548
      %v581 = vunpack.c.l.b16 %v549
      %v582 = vunpack.c.l.b16 %v550
      %v583 = vunpack.c.l.b16 %v551
      %v584 = vunpack.c.l.b16 %v552
      %v585 = vunpack.c.l.b16 %v553
      %v586 = vunpack.c.l.b16 %v554
      %v587 = vunpack.c.l.b16 %v555
      %v588 = vunpack.c.l.b16 %v556
      %v589 = vunpack.c.l.b16 %v557
      %v590 = vunpack.c.l.b16 %v558
      %v591 = vunpack.c.l.b16 %v559
      %v592 = vunpack.c.l.b16 %v560
      %v593 = vunpack.c.l.b16 %v561
      %v594 = vpack.c.b16 %v579, %v578
      %v595 = vpack.c.b16 %v581, %v580
      %v596 = vpack.c.b16 %v583, %v582
      %v597 = vpack.c.b16 %v585, %v584
      %v598 = vpack.c.b16 %v587, %v586
      %v599 = vpack.c.b16 %v589, %v588
      %v600 = vpack.c.b16 %v591, %v590
      %v601 = vpack.c.b16 %v593, %v592
      %610 = vmatprep.subr.bf16.mxu0 0
      %611 = vmatpush1.bf16.msra.mxu0 %v594
      %612 = vmatprep.subr.bf16.mxu0 0
      %613 = vmatpush1.bf16.msra.mxu0 %v595
      %614 = vmatprep.subr.bf16.mxu0 0
      %615 = vmatpush1.bf16.msra.mxu0 %v596
      %616 = vmatprep.subr.bf16.mxu0 0
      %617 = vmatpush1.bf16.msra.mxu0 %v597
      %618 = vmatprep.subr.bf16.mxu0 0
      %619 = vmatpush1.bf16.msra.mxu0 %v598
      %620 = vmatprep.subr.bf16.mxu0 0
      %621 = vmatpush1.bf16.msra.mxu0 %v599
      %622 = vmatprep.subr.bf16.mxu0 0
      %623 = vmatpush1.bf16.msra.mxu0 %v600
      %624 = vmatprep.subr.bf16.mxu0 0
      %625 = vmatpush1.bf16.msra.mxu0 %v601
      %626 = vmatprep.subr.bf16.mxu0 0
      %627 = vmatpush1.bf16.msra.mxu0 0
      %628 = vmatprep.subr.bf16.mxu0 0
      %629 = vmatpush1.bf16.msra.mxu0 0
      %630 = vmatprep.subr.bf16.mxu0 0
      %631 = vmatpush1.bf16.msra.mxu0 0
      %632 = vmatprep.subr.bf16.mxu0 0
      %633 = vmatpush1.bf16.msra.mxu0 0
      %634 = vmatprep.subr.bf16.mxu0 0
      %635 = vmatpush1.bf16.msra.mxu0 0
      %636 = vmatprep.subr.bf16.mxu0 0
      %637 = vmatpush1.bf16.msra.mxu0 0
      %638 = vmatprep.subr.bf16.mxu0 0
      %639 = vmatpush1.bf16.msra.mxu0 0
      %640 = vmatprep.subr.bf16.mxu0 0
      %641 = vmatpush1.bf16.msra.mxu0 0
      %642 = vmatprep.mubr.bf16.mxu0 0
      %643 = vmatmul.mubr.bf16.gmra.mrb[0].mxu0 %v545
      %v644 = vpop.f32.mrb[0].mxu0
      %v645 = vadd.f32 0.0, %v644
      %v646 = vpop.f32.mrb[0].mxu0
      %v647 = vpop.f32.mrb[0].mxu0
      %v648 = vpop.f32.mrb[0].mxu0
      %649 = vdwg.mxu0
      %v650 = vmax.f32 %v645, 0.0
      %v651 = vpack.c.bf16 %v650, %v650
      %v652 = vld [vmem:[%s5] sm:$0xf]
      %v653 = vld [vmem:[%s5 + $0x4] sm:$0xf]
      %v654 = vld [vmem:[%s5 + $0x8] sm:$0xf]
      %v655 = vld [vmem:[%s5 + $0xc] sm:$0xf]
      %v656 = vld [vmem:[%s5 + $0x10] sm:$0xf]
      %v657 = vld [vmem:[%s5 + $0x14] sm:$0xf]
      %v658 = vld [vmem:[%s5 + $0x18] sm:$0xf]
      %v659 = vld [vmem:[%s5 + $0x1c] sm:$0xf]
      %v660 = vld [vmem:[%s5 + $0x20] sm:$0xf]
      %v661 = vld [vmem:[%s5 + $0x24] sm:$0xf]
      %v662 = vld [vmem:[%s5 + $0x28] sm:$0xf]
      %v663 = vld [vmem:[%s5 + $0x2c] sm:$0xf]
      %v664 = vld [vmem:[%s5 + $0x30] sm:$0xf]
      %v665 = vld [vmem:[%s5 + $0x34] sm:$0xf]
      %v666 = vld [vmem:[%s5 + $0x38] sm:$0xf]
      %v667 = vld [vmem:[%s5 + $0x3c] sm:$0xf]
      %v684 = vunpack.c.l.b16 %v652
      %v685 = vunpack.c.l.b16 %v653
      %v686 = vunpack.c.l.b16 %v654
      %v687 = vunpack.c.l.b16 %v655
      %v688 = vunpack.c.l.b16 %v656
      %v689 = vunpack.c.l.b16 %v657
      %v690 = vunpack.c.l.b16 %v658
      %v691 = vunpack.c.l.b16 %v659
      %v692 = vunpack.c.l.b16 %v660
      %v693 = vunpack.c.l.b16 %v661
      %v694 = vunpack.c.l.b16 %v662
      %v695 = vunpack.c.l.b16 %v663
      %v696 = vunpack.c.l.b16 %v664
      %v697 = vunpack.c.l.b16 %v665
      %v698 = vunpack.c.l.b16 %v666
      %v699 = vunpack.c.l.b16 %v667
      %v700 = vpack.c.b16 %v685, %v684
      %v701 = vpack.c.b16 %v687, %v686
      %v702 = vpack.c.b16 %v689, %v688
      %v703 = vpack.c.b16 %v691, %v690
      %v704 = vpack.c.b16 %v693, %v692
      %v705 = vpack.c.b16 %v695, %v694
      %v706 = vpack.c.b16 %v697, %v696
      %v707 = vpack.c.b16 %v699, %v698
      %716 = vmatprep.subr.bf16.mxu0 0
      %717 = vmatpush1.bf16.msra.mxu0 %v700
      %718 = vmatprep.subr.bf16.mxu0 0
      %719 = vmatpush1.bf16.msra.mxu0 %v701
      %720 = vmatprep.subr.bf16.mxu0 0
      %721 = vmatpush1.bf16.msra.mxu0 %v702
      %722 = vmatprep.subr.bf16.mxu0 0
      %723 = vmatpush1.bf16.msra.mxu0 %v703
      %724 = vmatprep.subr.bf16.mxu0 0
      %725 = vmatpush1.bf16.msra.mxu0 %v704
      %726 = vmatprep.subr.bf16.mxu0 0
      %727 = vmatpush1.bf16.msra.mxu0 %v705
      %728 = vmatprep.subr.bf16.mxu0 0
      %729 = vmatpush1.bf16.msra.mxu0 %v706
      %730 = vmatprep.subr.bf16.mxu0 0
      %731 = vmatpush1.bf16.msra.mxu0 %v707
      %732 = vmatprep.subr.bf16.mxu0 0
      %733 = vmatpush1.bf16.msra.mxu0 0
      %734 = vmatprep.subr.bf16.mxu0 0
      %735 = vmatpush1.bf16.msra.mxu0 0
      %736 = vmatprep.subr.bf16.mxu0 0
      %737 = vmatpush1.bf16.msra.mxu0 0
      %738 = vmatprep.subr.bf16.mxu0 0
      %739 = vmatpush1.bf16.msra.mxu0 0
      %740 = vmatprep.subr.bf16.mxu0 0
      %741 = vmatpush1.bf16.msra.mxu0 0
      %742 = vmatprep.subr.bf16.mxu0 0
      %743 = vmatpush1.bf16.msra.mxu0 0
      %744 = vmatprep.subr.bf16.mxu0 0
      %745 = vmatpush1.bf16.msra.mxu0 0
      %746 = vmatprep.subr.bf16.mxu0 0
      %747 = vmatpush1.bf16.msra.mxu0 0
      %748 = vmatprep.mubr.bf16.mxu0 0
      %749 = vmatmul.mubr.bf16.gmra.mrb[0].mxu0 %v651
      %v750 = vpop.f32.mrb[0].mxu0
      %v751 = vadd.f32 0.0, %v750
      %v752 = vpop.f32.mrb[0].mxu0
      %v753 = vpop.f32.mrb[0].mxu0
      %v754 = vpop.f32.mrb[0].mxu0
      %755 = vdwg.mxu0
      %v756 = vand.u32 2147483647, %v751
      %v757 = vsel %vm84, %v756, 0.0
      %v758 = vrot.slane %v757, 4
      %v759 = vadd.f32 %v757, %v758
      %v760 = vrot.slane %v759, 2
      %v761 = vadd.f32 %v759, %v760
      %v762 = vrot.slane %v761, 1
      %v763 = vadd.f32 %v761, %v762
      %764 = vst [vmem:[%s8] sm:$0x1] %v763
    $region33: #{hashing_model_forward.1} parent=1 // pred_fallthru
      _
    // Predicated region
    $region34: #{hashing_model_forward.1} parent=1 // pred_check
      _
    $region35: #{hashing_model_forward.1} parent=1 // pred_check_branch
      %766 = sbr.rel (0) target = $region37
    $region36: #{hashing_model_forward.1} parent=1 // pred_region
      %s768 = ssub.s32 32, 32
      %769 = vsyncadd [#allocation4], %s768
      %s771 = sshll.u32 [#allocation3], 4
      %s772 = int_to_ptr.vmem [resolvable:$true] %s771
      %774 = dma.vmem_to_hbm [thread:$0]  %s772, 32, %s6, [#allocation4]
    $region37: #{hashing_model_forward.1} parent=1 // pred_fallthru
      _
    // Predicated region
    $region38: #{hashing_model_forward.1} parent=1 // pred_check
      _
    $region39: #{hashing_model_forward.1} parent=1 // pred_check_branch
      %776 = sbr.rel (0) target = $region41
    $region40: #{hashing_model_forward.1} parent=1 // pred_region
      %s778 = ssub.s32 32, 32
      %779 = vsyncadd [#allocation6], %s778
      %s781 = sshll.u32 [#allocation5], 4
      %s782 = int_to_ptr.vmem [resolvable:$true] %s781
      %784 = dma.vmem_to_hbm [thread:$0]  %s782, 32, %s7, [#allocation6]
    $region41: #{hashing_model_forward.1} parent=1 // pred_fallthru
      _
    // Predicated region
    $region42: #{hashing_model_forward.1} parent=1 // pred_check
      _
    $region43: #{hashing_model_forward.1} parent=1 // pred_check_branch
      %786 = sbr.rel (0) target = $region45
    $region44: #{hashing_model_forward.1} parent=1 // pred_region
      _
    $region45: #{hashing_model_forward.1} parent=1 // pred_fallthru
      _
    // Predicated region
    $region46: #{hashing_model_forward.1} parent=1 // pred_check
      _
    $region47: #{hashing_model_forward.1} parent=1 // pred_check_branch
      %788 = sbr.rel (0) target = $region49
    $region48: #{hashing_model_forward.1} parent=1 // pred_region
      %789 = dma.done [#allocation4], 32
    $region49: #{hashing_model_forward.1} parent=1 // pred_fallthru
      _
    // Predicated region
    $region50: #{hashing_model_forward.1} parent=1 // pred_check
      _
    $region51: #{hashing_model_forward.1} parent=1 // pred_check_branch
      %791 = sbr.rel (0) target = $region53
    $region52: #{hashing_model_forward.1} parent=1 // pred_region
      %792 = dma.done [#allocation6], 32
    $region53: #{hashing_model_forward.1} parent=1 // pred_fallthru
      _
    // Predicated region
    $region54: #{hashing_model_forward.1} parent=1 // pred_check
      _
    $region55: #{hashing_model_forward.1} parent=1 // pred_check_branch
      %794 = sbr.rel (0) target = $region57
    $region56: #{hashing_model_forward.1} parent=1 // pred_region
      _
    $region57: #{hashing_model_forward.1} parent=1 // pred_fallthru
      _
    %795 = vsyncpa [#allocation4], 1
    %796 = vsyncpa [#allocation6], 1

</llo_original>
